<compile_context>
chip_gen: v5e
topology: v5e:2x2
jax: 0.10.0
libtpu: 0.0.40
codegen_flags: <defaults>
</compile_context>

<pallas_src>
import jax
import jax.numpy as jnp
import numpy as np
from jax.experimental import pallas as pl
from jax.experimental.pallas import tpu as pltpu


def _ceil_to(x, m):
    return ((x + m - 1) // m) * m


def _make_mattnet_kernel(B, Bblk, HW, HW_pad, T, T_pad, T_tile, emit_att):
    need_rc_mask = (HW_pad != HW) or (T_pad != T)   # mask padded HW rows / T cols in the max
    need_b_mask = (B % Bblk) != 0                   # mask padded batch elements in the max

    def kernel(*refs):
        if emit_att:
            patches_ref, w_ref, audio_ref, bias_ref, att_ref, score_ref, emb_ref = refs
        else:
            patches_ref, w_ref, audio_ref, bias_ref, score_ref, emb_ref = refs
        # patches_ref: (Bblk*HW_pad, K9_pad)  bf16 im2col patches for this batch block
        # w_ref      : (K9_pad, D_pad)        bf16 folded conv weight (resident: constant index)
        # audio_ref  : (Bblk, D_pad, T_tile)  bf16 audio embedding tile
        # bias_ref   : (Bblk, 1, T_tile)      f32 precomputed bias @ audio term
        # att_ref    : (Bblk*HW_pad, T_tile)  attention output tile (lane-dense, bf16)
        # score_ref  : (1, 1, 128)            per-(b, t) block max (broadcast across lanes)
        # emb_ref    : (Bblk*HW_pad, D_pad)   bf16 scratch: image embedding for this batch block

        t = pl.program_id(1)

        # Folded 3x3 conv == ONE im2col matmul on the MXU: (Bblk*HW, 9*Cin) @ (9*Cin, D).
        # Computed once per batch block (first T tile) and reused across all T tiles.
        @pl.when(t == 0)
        def _():
            emb_ref[...] = jnp.dot(patches_ref[...], w_ref[...],
                                   preferred_element_type=jnp.float32).astype(jnp.bfloat16)

        if need_rc_mask:
            rows = jax.lax.broadcasted_iota(jnp.int32, (HW_pad, T_tile), 0)
            cols = jax.lax.broadcasted_iota(jnp.int32, (HW_pad, T_tile), 1)
            valid = (rows < HW) & ((cols + t * T_tile) < T)

        block_max = -jnp.inf
        for i in range(Bblk):  # short static unrolled loop over the batch block
            # HW_pad % 16 == 0 -> bf16 sublane-aligned static slice, no relayout.
            emb_i = emb_ref[pl.ds(i * HW_pad, HW_pad), :]
            att_i = jnp.dot(emb_i, audio_ref[i],
                            preferred_element_type=jnp.float32)      # (HW_pad, T_tile) f32
            att_i = att_i + bias_ref[i]                              # hoisted conv-bias (1, T_tile)
            if emit_att:
                att_ref[pl.ds(i * HW_pad, HW_pad), :] = att_i.astype(att_ref.dtype)

            if need_rc_mask:
                m_i = jnp.max(jnp.where(valid, att_i, -jnp.inf))
            else:
                m_i = jnp.max(att_i)
            if need_b_mask:
                gb = pl.program_id(0) * Bblk + i
                m_i = jnp.where(gb < B, m_i, -jnp.inf)
            block_max = jnp.maximum(block_max, m_i)

        score_ref[...] = jnp.broadcast_to(block_max, score_ref.shape).astype(jnp.float32)

    return kernel


def mattnet_forward(image_feats, audio_emb, conv_w, conv_b, *,
                    batch_block=4, t_tile_max=512,
                    att_dtype=jnp.bfloat16, return_att=True):
    """image_feats: (B, Cin, H, W) NCHW feature map (AlexNet `features` output);
    audio_emb: (B, D, T) AudioModel embedding; conv_w: (D, Cin, 3, 3) PyTorch OIHW; conv_b: (D,).
    Returns (score, att) with att of shape (B, H*W, T) float32, or (score, None) if not return_att."""
    B, Cin, H, W = image_feats.shape
    D = conv_w.shape[0]
    T = audio_emb.shape[-1]
    HW = H * W
    K9 = 9 * Cin

    # Padding: HW to 16 (bf16 sublane packing), lane dims to 128.
    HW_pad = _ceil_to(HW, 16)
    T_pad = _ceil_to(T, 128)
    D_pad = _ceil_to(D, 128)
    K9_pad = _ceil_to(K9, 128)

    # T tile: largest multiple of 128 that divides T_pad and is <= t_tile_max.
    t_tile_max = max(128, (t_tile_max // 128) * 128)
    T_tile = 128
    for cand in range(min(T_pad, t_tile_max), 127, -128):
        if T_pad % cand == 0:
            T_tile = cand
            break
    nt = T_pad // T_tile

    # Adaptive batch block: aim for >= ~4 grid steps so the pipeline overlaps and both v7x
    # TensorCores get work, without over-shrinking the conv matmul M dimension.
    Bblk = max(1, min(batch_block, B))
    while Bblk > 1 and pl.cdiv(B, Bblk) * nt < 4:
        Bblk = max(1, Bblk // 2)
    nb = pl.cdiv(B, Bblk)
    B_pad = nb * Bblk

    f32, bf16 = jnp.float32, jnp.bfloat16

    # Explicit VMEM budget: double-buffered pipelined blocks + resident scratch + headroom.
    def nbytes(shape, dt):
        return int(np.prod(shape)) * jnp.dtype(dt).itemsize

    work = (2 * nbytes((Bblk * HW_pad, K9_pad), bf16)        # im2col patches
            + 2 * nbytes((K9_pad, D_pad), bf16)              # folded conv weight (resident)
            + 2 * nbytes((Bblk, D_pad, T_tile), bf16)        # audio tile
            + 2 * nbytes((Bblk, 1, T_tile), f32)             # hoisted bias tile
            + 2 * nbytes((1, 1, 128), f32)                   # per-block score
            + nbytes((Bblk * HW_pad, D_pad), bf16))          # img_emb scratch
    if return_att:
        work += 2 * nbytes((Bblk * HW_pad, T_tile), att_dtype)
    vmem_limit = int(min(100 * 2**20, max(32 * 2**20, int(1.5 * work) + 8 * 2**20)))

    # --- im2col in the wrapper: (B, HW, 9*Cin), channel-last, tap order (kh, kw, c) ---
    x = jnp.transpose(image_feats, (0, 2, 3, 1)).astype(f32)              # NHWC
    x_halo = jnp.pad(x, ((0, 0), (1, 1), (1, 1), (0, 0)))                 # 1-pixel halo
    patches = jnp.concatenate(
        [x_halo[:, kh:kh + H, kw:kw + W, :] for kh in range(3) for kw in range(3)],
        axis=-1).reshape(B, HW, K9)
    patches = jnp.pad(patches, ((0, B_pad - B), (0, HW_pad - HW), (0, K9_pad - K9)))
    patches = patches.reshape(B_pad * HW_pad, K9_pad).astype(bf16)

    # --- folded conv weight: (kh, kw, Cin, D) -> (9*Cin, D), reshaped once, resident ---
    w = jnp.transpose(conv_w, (2, 3, 1, 0)).astype(f32).reshape(K9, D)
    w = jnp.pad(w, ((0, K9_pad - K9), (0, D_pad - D))).astype(bf16)

    # --- audio embedding (bf16 matmul operand) ---
    audio = jnp.pad(audio_emb.astype(f32),
                    ((0, B_pad - B), (0, D_pad - D), (0, T_pad - T))).astype(bf16)

    # --- hoisted conv bias: bias @ audio -> (B, T), added to att instead of (HW, D) broadcast ---
    bias_att = jnp.einsum('d,bdt->bt', conv_b.astype(f32), audio_emb.astype(f32))
    bias_att = jnp.pad(bias_att, ((0, B_pad - B), (0, T_pad - T))).reshape(B_pad, 1, T_pad)

    kernel = _make_mattnet_kernel(B, Bblk, HW, HW_pad, T, T_pad, T_tile, emit_att=return_att)

    in_specs = [
        pl.BlockSpec((Bblk * HW_pad, K9_pad), lambda b, t: (b, 0)),
        pl.BlockSpec((K9_pad, D_pad), lambda b, t: (0, 0)),      # constant index: weight resident
        pl.BlockSpec((Bblk, D_pad, T_tile), lambda b, t: (b, 0, t)),
        pl.BlockSpec((Bblk, 1, T_tile), lambda b, t: (b, 0, t)),
    ]
    score_shape = jax.ShapeDtypeStruct((nb * nt, 1, 128), jnp.float32)
    score_spec = pl.BlockSpec((1, 1, 128), lambda b, t: (b * nt + t, 0, 0))

    if return_att:
        out_shape = (jax.ShapeDtypeStruct((B_pad * HW_pad, T_pad), att_dtype), score_shape)
        out_specs = (pl.BlockSpec((Bblk * HW_pad, T_tile), lambda b, t: (b, t)), score_spec)
    else:
        out_shape = score_shape
        out_specs = score_spec

    outs = pl.pallas_call(
        kernel,
        out_shape=out_shape,
        grid=(nb, nt),
        in_specs=in_specs,
        out_specs=out_specs,
        scratch_shapes=[pltpu.VMEM((Bblk * HW_pad, D_pad), bf16)],
        compiler_params=pltpu.CompilerParams(
            dimension_semantics=("parallel", "arbitrary"),
            vmem_limit_bytes=vmem_limit),
    )(patches, w, audio, bias_att)

    if return_att:
        att_flat, scores = outs
        att = att_flat.reshape(B_pad, HW_pad, T_pad)[:B, :HW, :T].astype(jnp.float32)
    else:
        scores = outs
        att = None
    score = jnp.max(scores)
    return score, att


if __name__ == "__main__":
    key = jax.random.PRNGKey(0)
    k1, k2, k3, k4 = jax.random.split(key, 4)

    # Small shapes consistent with the module (real model: Cin=256 AlexNet channels,
    # D=embedding_dim~1024, 7x7 feature map, ~1024 audio frames).
    B, Cin, H, W = 2, 64, 8, 8
    D, T = 32, 16

    image_feats = jax.random.normal(k1, (B, Cin, H, W), jnp.float32)    # AlexNet features out
    audio_emb = jax.random.normal(k2, (B, D, T), jnp.float32)           # AudioModel out
    conv_w = 0.05 * jax.random.normal(k3, (D, Cin, 3, 3), jnp.float32)  # final image conv
    conv_b = 0.05 * jax.random.normal(k4, (D,), jnp.float32)

    score, att = mattnet_forward(image_feats, audio_emb, conv_w, conv_b, return_att=True)
    score_only, _ = mattnet_forward(image_feats, audio_emb, conv_w, conv_b, return_att=False)
    jax.block_until_ready((score, att, score_only))

    # Plain-JAX f32 reference of the same forward semantics.
    img = jax.lax.conv_general_dilated(
        image_feats, conv_w, window_strides=(1, 1), padding=((1, 1), (1, 1)),
        dimension_numbers=("NCHW", "OIHW", "NCHW")) + conv_b[None, :, None, None]
    img_emb_ref = jnp.transpose(img.reshape(B, D, H * W), (0, 2, 1))    # (B, HW, D)
    att_ref = jnp.einsum("bpd,bdt->bpt", img_emb_ref, audio_emb)

    # bf16-matmul + bf16-att tolerance: 5% relative, absolute slack scaled to output magnitude.
    scale = max(1.0, float(jnp.max(jnp.abs(att_ref))))
    np.testing.assert_allclose(np.asarray(att), np.asarray(att_ref),
                               rtol=5e-2, atol=5e-2 * scale)
    np.testing.assert_allclose(float(score), float(att_ref.max()), rtol=5e-2, atol=5e-2)
    np.testing.assert_allclose(float(score_only), float(score), rtol=1e-3, atol=1e-3)
    assert att.shape == (B, H * W, T)

    print("KERNEL_OK")
</pallas_src>

<mosaic_0001>
module attributes {stable_mosaic.version = 11 : i64} {
  func.func @kernel(%arg0: i32, %arg1: i32, %arg2: memref<64x640xbf16, #tpu.memory_space<vmem>>, %arg3: memref<640x128xbf16, #tpu.memory_space<vmem>>, %arg4: memref<1x128x128xbf16, #tpu.memory_space<vmem>>, %arg5: memref<1x1x128xf32, #tpu.memory_space<vmem>>, %arg6: memref<64x128xbf16, #tpu.memory_space<vmem>>, %arg7: memref<1x1x128xf32, #tpu.memory_space<vmem>>, %arg8: memref<64x128xbf16, #tpu.memory_space<vmem>>) attributes {dimension_semantics = [#tpu.dimension_semantics<parallel>, #tpu.dimension_semantics<arbitrary>], iteration_bounds = array<i64: 2, 1>, scalar_prefetch = 0 : i64, scratch_operands = 1 : i64, tpu.core_type = #tpu.core_type<tc>, window_params = [{transform_indices = @transform_0, window_bounds = array<i64: 64, 640>}, {pipeline_mode = #tpu.pipeline_mode<synchronous>, transform_indices = @transform_1, window_bounds = array<i64: 640, 128>}, {transform_indices = @transform_2, window_bounds = array<i64: 1, 128, 128>}, {transform_indices = @transform_3, window_bounds = array<i64: 1, 1, 128>}, {transform_indices = @transform_4, window_bounds = array<i64: 64, 128>}, {transform_indices = @transform_5, window_bounds = array<i64: 1, 1, 128>}]} {
    %c0_i32 = arith.constant 0 : i32
    %0 = arith.cmpi eq, %arg1, %c0_i32 : i32
    %1 = arith.extui %0 : i1 to i32
    %c0_i32_0 = arith.constant 0 : i32
    %2 = arith.cmpi ne, %1, %c0_i32_0 : i32
    scf.if %2 {
      %c0_16 = arith.constant 0 : index
      %c0_17 = arith.constant 0 : index
      %32 = vector.load %arg2[%c0_16, %c0_17] : memref<64x640xbf16, #tpu.memory_space<vmem>>, vector<64x640xbf16>
      %c0_18 = arith.constant 0 : index
      %c0_19 = arith.constant 0 : index
      %33 = vector.load %arg3[%c0_18, %c0_19] : memref<640x128xbf16, #tpu.memory_space<vmem>>, vector<640x128xbf16>
      %cst_20 = arith.constant dense<0.000000e+00> : vector<64x128xf32>
      %34 = tpu.matmul %32, %33, %cst_20 {dimension_numbers = #tpu.dot_dimension_numbers<[1], [0], [0], [1], [0, 0, 1, 1], [], []>} : vector<64x640xbf16>, vector<640x128xbf16>, vector<64x128xf32> -> vector<64x128xf32>
      %35 = arith.truncf %34 : vector<64x128xf32> to vector<64x128xbf16>
      %c0_21 = arith.constant 0 : index
      %c0_22 = arith.constant 0 : index
      %36 = vector.load %arg8[%c0_21, %c0_22] : memref<64x128xbf16, #tpu.memory_space<vmem>>, vector<64x128xbf16>
      tpu.vector_store %arg8[%c0_21, %c0_22], %35 {strides = array<i32>} : memref<64x128xbf16, #tpu.memory_space<vmem>>, vector<64x128xbf16>,
    } else {
    }
    %3 = tpu.iota {dimensions = array<i32: 0>} : vector<64x128xi32>
    %4 = tpu.iota {dimensions = array<i32: 1>} : vector<64x128xi32>
    %c64_i32 = arith.constant 64 : i32
    %5 = vector.broadcast %c64_i32 : i32 to vector<64x128xi32>
    %6 = arith.cmpi slt, %3, %5 : vector<64x128xi32>
    %c128_i32 = arith.constant 128 : i32
    %7 = arith.muli %arg1, %c128_i32 : i32
    %8 = vector.broadcast %7 : i32 to vector<64x128xi32>
    %9 = arith.addi %4, %8 : vector<64x128xi32>
    %c16_i32 = arith.constant 16 : i32
    %10 = vector.broadcast %c16_i32 : i32 to vector<64x128xi32>
    %11 = arith.cmpi slt, %9, %10 : vector<64x128xi32>
    %12 = arith.andi %6, %11 : vector<64x128xi1>
    %c0 = arith.constant 0 : index
    %c0_1 = arith.constant 0 : index
    %13 = vector.load %arg8[%c0, %c0_1] : memref<64x128xbf16, #tpu.memory_space<vmem>>, vector<64x128xbf16>
    %c0_2 = arith.constant 0 : index
    %c0_3 = arith.constant 0 : index
    %c0_4 = arith.constant 0 : index
    %14 = vector.load %arg4[%c0_2, %c0_3, %c0_4] : memref<1x128x128xbf16, #tpu.memory_space<vmem>>, vector<1x128x128xbf16>
    %15 = vector.shape_cast %14 : vector<1x128x128xbf16> to vector<128x128xbf16>
    %cst = arith.constant dense<0.000000e+00> : vector<64x128xf32>
    %16 = tpu.matmul %13, %15, %cst {dimension_numbers = #tpu.dot_dimension_numbers<[1], [0], [0], [1], [0, 0, 1, 1], [], []>} : vector<64x128xbf16>, vector<128x128xbf16>, vector<64x128xf32> -> vector<64x128xf32>
    %c0_5 = arith.constant 0 : index
    %c0_6 = arith.constant 0 : index
    %c0_7 = arith.constant 0 : index
    %17 = vector.load %arg5[%c0_5, %c0_6, %c0_7] : memref<1x1x128xf32, #tpu.memory_space<vmem>>, vector<1x1x128xf32>
    %18 = vector.shape_cast %17 : vector<1x1x128xf32> to vector<1x128xf32>
    %19 = vector.broadcast %18 : vector<1x128xf32> to vector<64x128xf32>
    %20 = arith.addf %16, %19 : vector<64x128xf32>
    %21 = arith.truncf %20 : vector<64x128xf32> to vector<64x128xbf16>
    %c0_8 = arith.constant 0 : index
    %c0_9 = arith.constant 0 : index
    %22 = vector.load %arg6[%c0_8, %c0_9] : memref<64x128xbf16, #tpu.memory_space<vmem>>, vector<64x128xbf16>
    tpu.vector_store %arg6[%c0_8, %c0_9], %21 {strides = array<i32>} : memref<64x128xbf16, #tpu.memory_space<vmem>>, vector<64x128xbf16>,
    %cst_10 = arith.constant 0xFF800000 : f32
    %23 = vector.broadcast %cst_10 : f32 to vector<64x128xf32>
    %24 = arith.select %12, %20, %23 : vector<64x128xi1>, vector<64x128xf32>
    %25 = vector.shape_cast %24 : vector<64x128xf32> to vector<1x64x128xf32>
    %cst_11 = arith.constant dense<0xFF800000> : vector<1xf32>
    %26 = vector.multi_reduction <maximumf>, %25, %cst_11 [1, 2] : vector<1x64x128xf32> to vector<1xf32>
    %27 = vector.shape_cast %26 : vector<1xf32> to vector<1x1x1xf32>
    %28 = vector.extract %27[0, 0, 0] : f32 from vector<1x1x1xf32>
    %cst_12 = arith.constant 0xFF800000 : f32
    %29 = arith.maximumf %cst_12, %28 : f32
    %30 = vector.broadcast %29 : f32 to vector<1x1x128xf32>
    %c0_13 = arith.constant 0 : index
    %c0_14 = arith.constant 0 : index
    %c0_15 = arith.constant 0 : index
    %31 = vector.load %arg7[%c0_13, %c0_14, %c0_15] : memref<1x1x128xf32, #tpu.memory_space<vmem>>, vector<1x1x128xf32>
    tpu.vector_store %arg7[%c0_13, %c0_14, %c0_15], %30 {strides = array<i32>} : memref<1x1x128xf32, #tpu.memory_space<vmem>>, vector<1x1x128xf32>,
    return
  }
  func.func @transform_0(%arg0: i32, %arg1: i32) -> (i32, i32) {
    %c0_i32 = arith.constant 0 : i32
    %c0_i32_0 = arith.constant 0 : i32
    return %arg0, %c0_i32 : i32, i32
  }
  func.func @transform_1(%arg0: i32, %arg1: i32) -> (i32, i32) {
    %c0_i32 = arith.constant 0 : i32
    %c0_i32_0 = arith.constant 0 : i32
    %c0_i32_1 = arith.constant 0 : i32
    return %c0_i32, %c0_i32_0 : i32, i32
  }
  func.func @transform_2(%arg0: i32, %arg1: i32) -> (i32, i32, i32) {
    %c0_i32 = arith.constant 0 : i32
    %c0_i32_0 = arith.constant 0 : i32
    return %arg0, %c0_i32, %arg1 : i32, i32, i32
  }
  func.func @transform_3(%arg0: i32, %arg1: i32) -> (i32, i32, i32) {
    %c0_i32 = arith.constant 0 : i32
    %c0_i32_0 = arith.constant 0 : i32
    return %arg0, %c0_i32, %arg1 : i32, i32, i32
  }
  func.func @transform_4(%arg0: i32, %arg1: i32) -> (i32, i32) {
    %c0_i32 = arith.constant 0 : i32
    return %arg0, %arg1 : i32, i32
  }
  func.func @transform_5(%arg0: i32, %arg1: i32) -> (i32, i32, i32) {
    %c1_i32 = arith.constant 1 : i32
    %0 = arith.muli %arg0, %c1_i32 : i32
    %1 = arith.addi %0, %arg1 : i32
    %c0_i32 = arith.constant 0 : i32
    %c0_i32_0 = arith.constant 0 : i32
    %c0_i32_1 = arith.constant 0 : i32
    return %1, %c0_i32, %c0_i32_0 : i32, i32, i32
  }
}

</mosaic_0001>

<llo_original>
// kernel: tpu_custom_call.1
$region0: #{tpu_custom_call.1}
  #allocation0 [shape = 'u32[]', space=smem, size = 0x4, offset = 0x4, fixed_abs, tag = 'smem constant byte address 0x4 - core index']
  #allocation1 [shape = 'u32[72,128]{1,0:T(1,128)}', space=vmem, size = 0x9000, scoped, tag = 'internal scratch']
  #allocation2 [shape = 'bf16[64,128]{1,0:T(8,128)(2,1)}', space=vmem, size = 0x4000, scoped, tag = 'scratch operand']
  %s0 = inlined_call_operand.hbm [shape: bf16[128,640], index: 0, kind: input, shape index: {}]
  %s1 = inlined_call_operand.hbm [shape: bf16[640,128], index: 1, kind: input, shape index: {}]
  %s2 = inlined_call_operand.hbm [shape: bf16[2,128,128], index: 2, kind: input, shape index: {}]
  %s3 = inlined_call_operand.vmem [shape: f32[2,1,128], index: 3, kind: input, shape index: {}]
  %s4 = inlined_call_operand.hbm [shape: bf16[128,128], index: 4, kind: output, shape index: {0}]
  %s5 = inlined_call_operand.hbm [shape: f32[2,1,128], index: 5, kind: output, shape index: {1}]
  %6 = xla_tuple %s4, %s5
  %s7 = sld [smem:[#allocation0]]
  $region73: #{tpu_custom_call.1} parent=0
    _
  %s9 = ssub.s32 1, %s7
  %s10 = scalar_select 0, %s9, %s7
  $region1: #{tpu_custom_call.1} parent=0
    #allocation3 [shape = 'u8[163840]{0}', space=vmem, size = 0x28000, scoped, tag = 'input window, operand 0']
    #allocation4 [shape = 's32[2]{0}', space=sflag, size = 0x8, scoped, tag = 'scoped memory for tpu_custom_call.1']
    #allocation5 [shape = 's32[2]{0}', space=sflag, size = 0x8, scoped, tag = 'scoped memory for tpu_custom_call.1']
    #allocation6 [shape = 'u8[163840]{0}', space=vmem, size = 0x28000, scoped, tag = 'input window, operand 1, single buffered']
    #allocation7 [shape = 's32[1]{0}', space=sflag, size = 0x4, scoped, tag = 'scoped memory for tpu_custom_call.1']
    #allocation8 [shape = 'u8[65536]{0}', space=vmem, size = 0x10000, scoped, tag = 'input window, operand 2']
    #allocation9 [shape = 'u8[32768]{0}', space=vmem, size = 0x8000, scoped, tag = 'output window, operand 0']
    #allocation10 [shape = 'u8[1024]{0}', space=vmem, size = 0x400, scoped, tag = 'output window, operand 1']
    #allocation11 [shape = 's32[2]{0}', space=sflag, size = 0x8, scoped, tag = 'scoped memory for tpu_custom_call.1']
    %11 = vsyncpa [#allocation4], 0
    %s12 = scalar_lea.sflag [#allocation4], 1
    %13 = vsyncpa %s12, 0
    %14 = vsyncpa [#allocation7], 0
    %15 = vsyncpa [#allocation5], 0
    %s16 = scalar_lea.sflag [#allocation5], 1
    %17 = vsyncpa %s16, 0
    %18 = vsyncpa [#allocation11], 0
    %s19 = scalar_lea.sflag [#allocation11], 1
    %20 = vsyncpa %s19, 0
    loop: start=0, step=1, limit=4
    $region2: #{tpu_custom_call.1} parent=1 // loop_pre_header
      _
    $region3: #{tpu_custom_call.1} parent=1 // loop_header
      %s22 = sphi 0, %s26
      %p23 = scmp.ge.s32.totalorder %s22, 4
      %s29 = sphi 0, %s41
      %s30 = sphi 0, %s37
      %s31 = sphi 0, %s29
      %s32 = sphi 0, %s30
      %s33 = sphi 0, %s31
      %s34 = sphi 0, %s32
      %s44 = sphi 0, %s46
      %s47 = sphi 0, %s44
      %s48 = sphi 0, %s47
      %s64 = sphi 0, %s48
      %s68 = sphi 0, %s68
      %s70 = sphi 0, %s68
      %s71 = sphi 0, %s70
      %s85 = sphi 0, %s71
      %s93 = sphi 0, %s95
      %s96 = sphi 0, %s93
      %s97 = sphi 0, %s96
      %s113 = sphi 0, %s97
      %s121 = sphi 0, %s123
      %s124 = sphi 0, %s121
      %s125 = sphi 0, %s124
      %s141 = sphi 0, %s125
      %s149 = sphi 0, %s151
      %s152 = sphi 0, %s149
      %s153 = sphi 0, %s152
      %s169 = sphi 0, %s153
      %s177 = sphi 0, %s179
      %s180 = sphi 0, %s177
      %s181 = sphi 0, %s180
      %s197 = sphi 0, %s181
    $region4: #{tpu_custom_call.1} parent=1 // loop_header_branch
      %25 = sbr.rel (%p23) target = $region8
    $region5: #{tpu_custom_call.1} parent=1 // loop_body
      %s27 = ssub.s32 %s22, 1
      %s28 = ssub.s32 %s22, 2
      %s35 = sadd.s32 1, %s30
      %p36 = scmp.ge.s32.totalorder %s35, 1
      %s37 = scalar_select %p36, 0, %s35
      %s38 = sadd.s32 1, %s29
      %s39 = scalar_select %p36, %s38, %s29
      %p40 = scmp.ge.s32.totalorder %s39, 2
      %s41 = scalar_select %p40, 0, %s39
      %s42 = ssub.s32 %s29, %s41
      %p43 = scmp.eq.s32.totalorder %s42, 0
      %s45 = sadd.s32 %s44, 1
      %s46 = scalar_select %p43, %s44, %s45
      %p49 = pneg %p43
      %p50 = scmp.eq.s32.totalorder %s22, 1
      %p51 = por %p49, %p50
      %p52 = scmp.ne.s32.totalorder %s44, %s47
      %p53 = scmp.eq.s32.totalorder %s22, 0
      %p54 = por %p52, %p53
      %p55 = scmp.ne.s32.totalorder %s44, %s47
      %p56 = scmp.eq.s32.totalorder %s27, 1
      %p57 = por %p55, %p56
      %p58 = scmp.ne.s32.totalorder %s47, %s48
      %p59 = scmp.eq.s32.totalorder %s27, 0
      %p60 = por %p58, %p59
      %p61 = scmp.ne.s32.totalorder %s47, %s48
      %p62 = scmp.eq.s32.totalorder %s28, 1
      %p63 = por %p61, %p62
      %p65 = scmp.ne.s32.totalorder %s48, %s64
      %p66 = scmp.eq.s32.totalorder %s28, 0
      %p67 = por %p65, %p66
      %s69 = sadd.s32 %s68, 1
      %p72 = scmp.eq.s32.totalorder %s22, 1
      %p73 = scmp.ne.s32.totalorder %s68, %s70
      %p74 = scmp.eq.s32.totalorder %s22, 0
      %p75 = por %p73, %p74
      %p76 = scmp.ne.s32.totalorder %s68, %s70
      %p77 = scmp.eq.s32.totalorder %s27, 1
      %p78 = por %p76, %p77
      %p79 = scmp.ne.s32.totalorder %s70, %s71
      %p80 = scmp.eq.s32.totalorder %s27, 0
      %p81 = por %p79, %p80
      %p82 = scmp.ne.s32.totalorder %s70, %s71
      %p83 = scmp.eq.s32.totalorder %s28, 1
      %p84 = por %p82, %p83
      %p86 = scmp.ne.s32.totalorder %s71, %s85
      %p87 = scmp.eq.s32.totalorder %s28, 0
      %p88 = por %p86, %p87
      %s89 = ssub.s32 %s29, %s41
      %s90 = ssub.s32 %s30, %s37
      %s91 = sor.u32 %s89, %s90
      %p92 = scmp.eq.s32.totalorder %s91, 0
      %s94 = sadd.s32 %s93, 1
      %s95 = scalar_select %p92, %s93, %s94
      %p98 = pneg %p92
      %p99 = scmp.eq.s32.totalorder %s22, 1
      %p100 = por %p98, %p99
      %p101 = scmp.ne.s32.totalorder %s93, %s96
      %p102 = scmp.eq.s32.totalorder %s22, 0
      %p103 = por %p101, %p102
      %p104 = scmp.ne.s32.totalorder %s93, %s96
      %p105 = scmp.eq.s32.totalorder %s27, 1
      %p106 = por %p104, %p105
      %p107 = scmp.ne.s32.totalorder %s96, %s97
      %p108 = scmp.eq.s32.totalorder %s27, 0
      %p109 = por %p107, %p108
      %p110 = scmp.ne.s32.totalorder %s96, %s97
      %p111 = scmp.eq.s32.totalorder %s28, 1
      %p112 = por %p110, %p111
      %p114 = scmp.ne.s32.totalorder %s97, %s113
      %p115 = scmp.eq.s32.totalorder %s28, 0
      %p116 = por %p114, %p115
      %s117 = ssub.s32 %s29, %s41
      %s118 = ssub.s32 %s30, %s37
      %s119 = sor.u32 %s117, %s118
      %p120 = scmp.eq.s32.totalorder %s119, 0
      %s122 = sadd.s32 %s121, 1
      %s123 = scalar_select %p120, %s121, %s122
      %p126 = pneg %p120
      %p127 = scmp.eq.s32.totalorder %s22, 1
      %p128 = por %p126, %p127
      %p129 = scmp.ne.s32.totalorder %s121, %s124
      %p130 = scmp.eq.s32.totalorder %s22, 0
      %p131 = por %p129, %p130
      %p132 = scmp.ne.s32.totalorder %s121, %s124
      %p133 = scmp.eq.s32.totalorder %s27, 1
      %p134 = por %p132, %p133
      %p135 = scmp.ne.s32.totalorder %s124, %s125
      %p136 = scmp.eq.s32.totalorder %s27, 0
      %p137 = por %p135, %p136
      %p138 = scmp.ne.s32.totalorder %s124, %s125
      %p139 = scmp.eq.s32.totalorder %s28, 1
      %p140 = por %p138, %p139
      %p142 = scmp.ne.s32.totalorder %s125, %s141
      %p143 = scmp.eq.s32.totalorder %s28, 0
      %p144 = por %p142, %p143
      %s145 = ssub.s32 %s29, %s41
      %s146 = ssub.s32 %s30, %s37
      %s147 = sor.u32 %s145, %s146
      %p148 = scmp.eq.s32.totalorder %s147, 0
      %s150 = sadd.s32 %s149, 1
      %s151 = scalar_select %p148, %s149, %s150
      %p154 = pneg %p148
      %p155 = scmp.eq.s32.totalorder %s22, 1
      %p156 = por %p154, %p155
      %p157 = scmp.ne.s32.totalorder %s149, %s152
      %p158 = scmp.eq.s32.totalorder %s22, 0
      %p159 = por %p157, %p158
      %p160 = scmp.ne.s32.totalorder %s149, %s152
      %p161 = scmp.eq.s32.totalorder %s27, 1
      %p162 = por %p160, %p161
      %p163 = scmp.ne.s32.totalorder %s152, %s153
      %p164 = scmp.eq.s32.totalorder %s27, 0
      %p165 = por %p163, %p164
      %p166 = scmp.ne.s32.totalorder %s152, %s153
      %p167 = scmp.eq.s32.totalorder %s28, 1
      %p168 = por %p166, %p167
      %p170 = scmp.ne.s32.totalorder %s153, %s169
      %p171 = scmp.eq.s32.totalorder %s28, 0
      %p172 = por %p170, %p171
      %s173 = sadd.s32 %s29, %s30
      %s174 = sadd.s32 %s41, %s37
      %s175 = ssub.s32 %s173, %s174
      %p176 = scmp.eq.s32.totalorder %s175, 0
      %s178 = sadd.s32 %s177, 1
      %s179 = scalar_select %p176, %s177, %s178
      %p182 = pneg %p176
      %p183 = scmp.eq.s32.totalorder %s22, 1
      %p184 = por %p182, %p183
      %p185 = scmp.ne.s32.totalorder %s177, %s180
      %p186 = scmp.eq.s32.totalorder %s22, 0
      %p187 = por %p185, %p186
      %p188 = scmp.ne.s32.totalorder %s177, %s180
      %p189 = scmp.eq.s32.totalorder %s27, 1
      %p190 = por %p188, %p189
      %p191 = scmp.ne.s32.totalorder %s180, %s181
      %p192 = scmp.eq.s32.totalorder %s27, 0
      %p193 = por %p191, %p192
      %p194 = scmp.ne.s32.totalorder %s180, %s181
      %p195 = scmp.eq.s32.totalorder %s28, 1
      %p196 = por %p194, %p195
      %p198 = scmp.ne.s32.totalorder %s181, %s197
      %p199 = scmp.eq.s32.totalorder %s28, 0
      %p200 = por %p198, %p199
      %p201 = scmp.le.s32.totalorder 1, %s22
      %p202 = scmp.lt.s32.totalorder %s22, 3
      %p203 = pnand %p201, %p202
      %p204 = pneg %p203
      // Predicated region
      $region9: #{tpu_custom_call.1} parent=5 // pred_check
        _
      $region10: #{tpu_custom_call.1} parent=5 // pred_check_branch
        %206 = sbr.rel (%p203) target = $region12
      $region11: #{tpu_custom_call.1} parent=5 // pred_region
        %s207 = ssub.s32 %s22, 1
        // Predicated region
        $region13: #{tpu_custom_call.1} parent=11 // pred_check
          %p208 = pneg %p81
        $region14: #{tpu_custom_call.1} parent=11 // pred_check_branch
          %210 = sbr.rel (%p208) target = $region16
        $region15: #{tpu_custom_call.1} parent=11 // pred_region
          %212 = vsyncadd [#allocation7], 0
          %s213 = sshll.u32 %s1, 4
          %s214 = int_to_ptr.hbm [resolvable:$true] %s213
          %s215 = sshll.u32 [#allocation6], 4
          %s216 = int_to_ptr.vmem [resolvable:$true] %s215
          %221 = dma.hbm_to_vmem [thread:$0]  %s214, 5120, %s216, [#allocation7], 64, 64, 4
        $region16: #{tpu_custom_call.1} parent=11 // pred_fallthru
          _
      $region12: #{tpu_custom_call.1} parent=5 // pred_fallthru
        _
      %p222 = scmp.lt.s32.totalorder %s22, 2
      // Predicated region
      $region17: #{tpu_custom_call.1} parent=5 // pred_check
        %p223 = pneg %p222
      $region18: #{tpu_custom_call.1} parent=5 // pred_check_branch
        %225 = sbr.rel (%p223) target = $region20
      $region19: #{tpu_custom_call.1} parent=5 // pred_region
        // Predicated region
        $region21: #{tpu_custom_call.1} parent=19 // pred_check
          %p226 = pneg %p54
        $region22: #{tpu_custom_call.1} parent=19 // pred_check_branch
          %228 = sbr.rel (%p226) target = $region24
        $region23: #{tpu_custom_call.1} parent=19 // pred_region
          %s229 = sand.u32 %s22, 1
          %s230 = scalar_lea.sflag [#allocation4], %s229
          %s231 = sand.u32 %s44, 1
          %s232 = smul.addr %s231, 160
          %s233 = scalar_lea.vmem [#allocation3], %s232
          %s234 = smul.u32 8, %s29
          %236 = vsyncadd %s230, 0
          %s237 = smul.addr %s234, 5
          %s238 = smul.addr %s237, 4
          %s239 = scalar_lea.hbm %s0, %s238
          %s240 = sshll.u32 %s239, 4
          %s241 = int_to_ptr.hbm [resolvable:$true] %s240
          %s242 = sshll.u32 %s233, 4
          %s243 = int_to_ptr.vmem [resolvable:$true] %s242
          %248 = dma.hbm_to_vmem [thread:$0]  %s241, 2560, %s243, %s230, 320, 320, 20
        $region24: #{tpu_custom_call.1} parent=19 // pred_fallthru
          _
        // Predicated region
        $region25: #{tpu_custom_call.1} parent=19 // pred_check
          %p249 = pneg %p103
        $region26: #{tpu_custom_call.1} parent=19 // pred_check_branch
          %251 = sbr.rel (%p249) target = $region28
        $region27: #{tpu_custom_call.1} parent=19 // pred_region
          %s252 = sand.u32 %s22, 1
          %s253 = scalar_lea.sflag [#allocation4], %s252
          %s254 = sand.u32 %s93, 1
          %s255 = smul.addr %s254, 64
          %s256 = scalar_lea.vmem [#allocation8], %s255
          %258 = vsyncadd %s253, 0
          %s259 = smul.addr %s29, 16
          %s260 = sadd.s32 %s30, %s259
          %s261 = smul.addr %s260, 4
          %s262 = scalar_lea.hbm %s2, %s261
          %s263 = sshll.u32 %s262, 4
          %s264 = int_to_ptr.hbm [resolvable:$true] %s263
          %s265 = sshll.u32 %s256, 4
          %s266 = int_to_ptr.vmem [resolvable:$true] %s265
          %271 = dma.hbm_to_vmem [thread:$0]  %s264, 1024, %s266, %s253, 64, 64, 4
        $region28: #{tpu_custom_call.1} parent=19 // pred_fallthru
          _
        // Predicated region
        $region29: #{tpu_custom_call.1} parent=19 // pred_check
          %p272 = pneg %p131
        $region30: #{tpu_custom_call.1} parent=19 // pred_check_branch
          %274 = sbr.rel (%p272) target = $region32
        $region31: #{tpu_custom_call.1} parent=19 // pred_region
          %p275 = scmp.lt.s32.totalorder %s29, 1
          %s276 = scalar_select %p275, %s29, 1
          %p277 = scmp.lt.s32.totalorder %s30, 0
          %s278 = scalar_select %p277, %s30, 0
          %s279 = sadd.s32 %s278, %s276
          %s280 = scalar_lea.vmem %s3, %s279
        $region32: #{tpu_custom_call.1} parent=19 // pred_fallthru
          _
      $region20: #{tpu_custom_call.1} parent=5 // pred_fallthru
        _
      %p281 = scmp.le.s32.totalorder 1, %s22
      %p282 = scmp.lt.s32.totalorder %s22, 3
      %p283 = pnand %p281, %p282
      %p284 = pneg %p283
      // Predicated region
      $region33: #{tpu_custom_call.1} parent=5 // pred_check
        _
      $region34: #{tpu_custom_call.1} parent=5 // pred_check_branch
        %286 = sbr.rel (%p283) target = $region36
      $region35: #{tpu_custom_call.1} parent=5 // pred_region
        %s287 = ssub.s32 %s22, 1
        %s288 = sand.u32 %s27, 1
        %s289 = scalar_lea.sflag [#allocation4], %s288
        %s290 = sand.u32 %s47, 1
        %s291 = smul.addr %s290, 160
        %s292 = scalar_lea.vmem [#allocation3], %s291
        // Predicated region
        $region37: #{tpu_custom_call.1} parent=35 // pred_check
          %p293 = pneg %p60
        $region38: #{tpu_custom_call.1} parent=35 // pred_check_branch
          %295 = sbr.rel (%p293) target = $region40
        $region39: #{tpu_custom_call.1} parent=35 // pred_region
          %297 = dma.done %s289, 2560
        $region40: #{tpu_custom_call.1} parent=35 // pred_fallthru
          _
        // Predicated region
        $region41: #{tpu_custom_call.1} parent=35 // pred_check
          %p298 = pneg %p81
        $region42: #{tpu_custom_call.1} parent=35 // pred_check_branch
          %300 = sbr.rel (%p298) target = $region44
        $region43: #{tpu_custom_call.1} parent=35 // pred_region
          %302 = dma.done [#allocation7], 5120
        $region44: #{tpu_custom_call.1} parent=35 // pred_fallthru
          _
        %s303 = sand.u32 %s27, 1
        %s304 = scalar_lea.sflag [#allocation4], %s303
        %s305 = sand.u32 %s96, 1
        %s306 = smul.addr %s305, 64
        %s307 = scalar_lea.vmem [#allocation8], %s306
        // Predicated region
        $region45: #{tpu_custom_call.1} parent=35 // pred_check
          %p308 = pneg %p109
        $region46: #{tpu_custom_call.1} parent=35 // pred_check_branch
          %310 = sbr.rel (%p308) target = $region48
        $region47: #{tpu_custom_call.1} parent=35 // pred_region
          %312 = dma.done %s304, 1024
        $region48: #{tpu_custom_call.1} parent=35 // pred_fallthru
          _
        %s313 = sand.u32 %s27, 1
        %s314 = scalar_lea.sflag [#allocation4], %s313
        %s315 = sand.u32 %s47, 1
        %s316 = smul.addr %s315, 160
        %s317 = scalar_lea.vmem [#allocation3], %s316
        %p318 = pneg %p60
        %p319 = pneg %p57
        %p320 = pneg %p81
        %p321 = pneg %p78
        %s322 = sand.u32 %s27, 1
        %s323 = scalar_lea.sflag [#allocation4], %s322
        %s324 = sand.u32 %s96, 1
        %s325 = smul.addr %s324, 64
        %s326 = scalar_lea.vmem [#allocation8], %s325
        %p327 = pneg %p109
        %p328 = pneg %p106
        %p329 = scmp.lt.s32.totalorder %s31, 1
        %s330 = scalar_select %p329, %s31, 1
        %p331 = scmp.lt.s32.totalorder %s32, 0
        %s332 = scalar_select %p331, %s32, 0
        %s333 = sadd.s32 %s332, %s330
        %s334 = scalar_lea.vmem %s3, %s333
        %p335 = pneg %p137
        %p336 = pneg %p134
        %p337 = pneg %p165
        %p338 = pneg %p162
        %s339 = sand.u32 %s152, 1
        %s340 = scalar_lea.sflag [#allocation5], %s339
        %s341 = sand.u32 %s152, 1
        %s342 = smul.addr %s341, 32
        %s343 = scalar_lea.vmem [#allocation9], %s342
        %p344 = pneg %p193
        %p345 = pneg %p190
        %s346 = sand.u32 %s180, 1
        %s347 = scalar_lea.sflag [#allocation11], %s346
        %s348 = sand.u32 %s180, 1
        %s349 = scalar_lea.vmem [#allocation10], %s348
        %s350 = smul.u32 8, %s31
        %p351 = scmp.lt.s32.totalorder %s31, 1
        %s352 = scalar_select %p351, %s31, 1
        %p353 = scmp.lt.s32.totalorder %s32, 0
        %s354 = scalar_select %p353, %s32, 0
        %s355 = sadd.s32 %s354, %s352
        %s356 = scalar_lea.vmem %s3, %s355
        %s357 = smul.u32 8, %s31
        %s358 = sadd.s32 %s31, %s32
        %p359 = scmp.eq.s32.totalorder %s32, 0
        // Predicated region
        $region49: #{tpu_custom_call.1} parent=35 // pred_check
          %p360 = pneg %p359
        $region50: #{tpu_custom_call.1} parent=35 // pred_check_branch
          %362 = sbr.rel (%p360) target = $region52
        $region51: #{tpu_custom_call.1} parent=35 // pred_region
          %v363 = vld [vmem:[%s292] sm:$0xff]
          %v364 = vld [vmem:[%s292 + $0x8] sm:$0xff]
          %v365 = vld [vmem:[%s292 + $0x10] sm:$0xf]
          %v366 = vld [vmem:[%s292 + $0x14] sm:$0xff]
          %v367 = vld [vmem:[%s292 + $0x1c] sm:$0xff]
          %v368 = vld [vmem:[%s292 + $0x24] sm:$0xf]
          %v369 = vld [vmem:[%s292 + $0x28] sm:$0xff]
          %v370 = vld [vmem:[%s292 + $0x30] sm:$0xff]
          %v371 = vld [vmem:[%s292 + $0x38] sm:$0xf]
          %v372 = vld [vmem:[%s292 + $0x3c] sm:$0xff]
          %v373 = vld [vmem:[%s292 + $0x44] sm:$0xff]
          %v374 = vld [vmem:[%s292 + $0x4c] sm:$0xf]
          %v375 = vld [vmem:[%s292 + $0x50] sm:$0xff]
          %v376 = vld [vmem:[%s292 + $0x58] sm:$0xff]
          %v377 = vld [vmem:[%s292 + $0x60] sm:$0xf]
          %v378 = vld [vmem:[%s292 + $0x64] sm:$0xff]
          %v379 = vld [vmem:[%s292 + $0x6c] sm:$0xff]
          %v380 = vld [vmem:[%s292 + $0x74] sm:$0xf]
          %v381 = vld [vmem:[%s292 + $0x78] sm:$0xff]
          %v382 = vld [vmem:[%s292 + $0x80] sm:$0xff]
          %v383 = vld [vmem:[%s292 + $0x88] sm:$0xf]
          %v384 = vld [vmem:[%s292 + $0x8c] sm:$0xff]
          %v385 = vld [vmem:[%s292 + $0x94] sm:$0xff]
          %v386 = vld [vmem:[%s292 + $0x9c] sm:$0xf]
          %v387 = vld [vmem:[#allocation6] sm:$0xf]
          %v388 = vld [vmem:[#allocation6 + $0x4] sm:$0xf]
          %v389 = vld [vmem:[#allocation6 + $0x8] sm:$0xf]
          %v390 = vld [vmem:[#allocation6 + $0xc] sm:$0xf]
          %v391 = vld [vmem:[#allocation6 + $0x10] sm:$0xf]
          %v392 = vld [vmem:[#allocation6 + $0x14] sm:$0xf]
          %v393 = vld [vmem:[#allocation6 + $0x18] sm:$0xf]
          %v394 = vld [vmem:[#allocation6 + $0x1c] sm:$0xf]
          %v395 = vld [vmem:[#allocation6 + $0x20] sm:$0xf]
          %v396 = vld [vmem:[#allocation6 + $0x24] sm:$0xf]
          %v397 = vld [vmem:[#allocation6 + $0x28] sm:$0xf]
          %v398 = vld [vmem:[#allocation6 + $0x2c] sm:$0xf]
          %v399 = vld [vmem:[#allocation6 + $0x30] sm:$0xf]
          %v400 = vld [vmem:[#allocation6 + $0x34] sm:$0xf]
          %v401 = vld [vmem:[#allocation6 + $0x38] sm:$0xf]
          %v402 = vld [vmem:[#allocation6 + $0x3c] sm:$0xf]
          %v403 = vld [vmem:[#allocation6 + $0x40] sm:$0xf]
          %v404 = vld [vmem:[#allocation6 + $0x44] sm:$0xf]
          %v405 = vld [vmem:[#allocation6 + $0x48] sm:$0xf]
          %v406 = vld [vmem:[#allocation6 + $0x4c] sm:$0xf]
          %v407 = vld [vmem:[#allocation6 + $0x50] sm:$0xf]
          %v408 = vld [vmem:[#allocation6 + $0x54] sm:$0xf]
          %v409 = vld [vmem:[#allocation6 + $0x58] sm:$0xf]
          %v410 = vld [vmem:[#allocation6 + $0x5c] sm:$0xf]
          %v411 = vld [vmem:[#allocation6 + $0x60] sm:$0xf]
          %v412 = vld [vmem:[#allocation6 + $0x64] sm:$0xf]
          %v413 = vld [vmem:[#allocation6 + $0x68] sm:$0xf]
          %v414 = vld [vmem:[#allocation6 + $0x6c] sm:$0xf]
          %v415 = vld [vmem:[#allocation6 + $0x70] sm:$0xf]
          %v416 = vld [vmem:[#allocation6 + $0x74] sm:$0xf]
          %v417 = vld [vmem:[#allocation6 + $0x78] sm:$0xf]
          %v418 = vld [vmem:[#allocation6 + $0x7c] sm:$0xf]
          %v419 = vld [vmem:[#allocation6 + $0x80] sm:$0xf]
          %v420 = vld [vmem:[#allocation6 + $0x84] sm:$0xf]
          %v421 = vld [vmem:[#allocation6 + $0x88] sm:$0xf]
          %v422 = vld [vmem:[#allocation6 + $0x8c] sm:$0xf]
          %v423 = vld [vmem:[#allocation6 + $0x90] sm:$0xf]
          %v424 = vld [vmem:[#allocation6 + $0x94] sm:$0xf]
          %v425 = vld [vmem:[#allocation6 + $0x98] sm:$0xf]
          %v426 = vld [vmem:[#allocation6 + $0x9c] sm:$0xf]
          %v427 = vld [vmem:[#allocation6 + $0xa0] sm:$0xf]
          %v428 = vld [vmem:[#allocation6 + $0xa4] sm:$0xf]
          %v429 = vld [vmem:[#allocation6 + $0xa8] sm:$0xf]
          %v430 = vld [vmem:[#allocation6 + $0xac] sm:$0xf]
          %v431 = vld [vmem:[#allocation6 + $0xb0] sm:$0xf]
          %v432 = vld [vmem:[#allocation6 + $0xb4] sm:$0xf]
          %v433 = vld [vmem:[#allocation6 + $0xb8] sm:$0xf]
          %v434 = vld [vmem:[#allocation6 + $0xbc] sm:$0xf]
          %v435 = vld [vmem:[#allocation6 + $0xc0] sm:$0xf]
          %v436 = vld [vmem:[#allocation6 + $0xc4] sm:$0xf]
          %v437 = vld [vmem:[#allocation6 + $0xc8] sm:$0xf]
          %v438 = vld [vmem:[#allocation6 + $0xcc] sm:$0xf]
          %v439 = vld [vmem:[#allocation6 + $0xd0] sm:$0xf]
          %v440 = vld [vmem:[#allocation6 + $0xd4] sm:$0xf]
          %v441 = vld [vmem:[#allocation6 + $0xd8] sm:$0xf]
          %v442 = vld [vmem:[#allocation6 + $0xdc] sm:$0xf]
          %v443 = vld [vmem:[#allocation6 + $0xe0] sm:$0xf]
          %v444 = vld [vmem:[#allocation6 + $0xe4] sm:$0xf]
          %v445 = vld [vmem:[#allocation6 + $0xe8] sm:$0xf]
          %v446 = vld [vmem:[#allocation6 + $0xec] sm:$0xf]
          %v447 = vld [vmem:[#allocation6 + $0xf0] sm:$0xf]
          %v448 = vld [vmem:[#allocation6 + $0xf4] sm:$0xf]
          %v449 = vld [vmem:[#allocation6 + $0xf8] sm:$0xf]
          %v450 = vld [vmem:[#allocation6 + $0xfc] sm:$0xf]
          %v451 = vld [vmem:[#allocation6 + $0x100] sm:$0xf]
          %v452 = vld [vmem:[#allocation6 + $0x104] sm:$0xf]
          %v453 = vld [vmem:[#allocation6 + $0x108] sm:$0xf]
          %v454 = vld [vmem:[#allocation6 + $0x10c] sm:$0xf]
          %v455 = vld [vmem:[#allocation6 + $0x110] sm:$0xf]
          %v456 = vld [vmem:[#allocation6 + $0x114] sm:$0xf]
          %v457 = vld [vmem:[#allocation6 + $0x118] sm:$0xf]
          %v458 = vld [vmem:[#allocation6 + $0x11c] sm:$0xf]
          %v459 = vld [vmem:[#allocation6 + $0x120] sm:$0xf]
          %v460 = vld [vmem:[#allocation6 + $0x124] sm:$0xf]
          %v461 = vld [vmem:[#allocation6 + $0x128] sm:$0xf]
          %v462 = vld [vmem:[#allocation6 + $0x12c] sm:$0xf]
          %v463 = vld [vmem:[#allocation6 + $0x130] sm:$0xf]
          %v464 = vld [vmem:[#allocation6 + $0x134] sm:$0xf]
          %v465 = vld [vmem:[#allocation6 + $0x138] sm:$0xf]
          %v466 = vld [vmem:[#allocation6 + $0x13c] sm:$0xf]
          %v491 = vunpack.c.l.b16 %v363
          %v492 = vunpack.c.h.b16 %v363
          %v493 = vunpack.c.l.b16 %v364
          %v494 = vunpack.c.h.b16 %v364
          %v495 = vunpack.c.l.b16 %v365
          %v496 = vunpack.c.l.b16 %v366
          %v497 = vunpack.c.h.b16 %v366
          %v498 = vunpack.c.l.b16 %v367
          %v499 = vunpack.c.h.b16 %v367
          %v500 = vunpack.c.l.b16 %v368
          %v501 = vunpack.c.l.b16 %v369
          %v502 = vunpack.c.h.b16 %v369
          %v503 = vunpack.c.l.b16 %v370
          %v504 = vunpack.c.h.b16 %v370
          %v505 = vunpack.c.l.b16 %v371
          %v506 = vunpack.c.l.b16 %v372
          %v507 = vunpack.c.h.b16 %v372
          %v508 = vunpack.c.l.b16 %v373
          %v509 = vunpack.c.h.b16 %v373
          %v510 = vunpack.c.l.b16 %v374
          %v511 = vunpack.c.l.b16 %v375
          %v512 = vunpack.c.h.b16 %v375
          %v513 = vunpack.c.l.b16 %v376
          %v514 = vunpack.c.h.b16 %v376
          %v515 = vunpack.c.l.b16 %v377
          %v516 = vunpack.c.l.b16 %v378
          %v517 = vunpack.c.h.b16 %v378
          %v518 = vunpack.c.l.b16 %v379
          %v519 = vunpack.c.h.b16 %v379
          %v520 = vunpack.c.l.b16 %v380
          %v521 = vunpack.c.l.b16 %v381
          %v522 = vunpack.c.h.b16 %v381
          %v523 = vunpack.c.l.b16 %v382
          %v524 = vunpack.c.h.b16 %v382
          %v525 = vunpack.c.l.b16 %v383
          %v526 = vunpack.c.l.b16 %v384
          %v527 = vunpack.c.h.b16 %v384
          %v528 = vunpack.c.l.b16 %v385
          %v529 = vunpack.c.h.b16 %v385
          %v530 = vunpack.c.l.b16 %v386
          %v531 = vpack.c.b16 %v496, %v491
          %v532 = vpack.c.b16 %v497, %v492
          %v533 = vpack.c.b16 %v498, %v493
          %v534 = vpack.c.b16 %v499, %v494
          %v535 = vpack.c.b16 %v500, %v495
          %v536 = vpack.c.b16 %v506, %v501
          %v537 = vpack.c.b16 %v507, %v502
          %v538 = vpack.c.b16 %v508, %v503
          %v539 = vpack.c.b16 %v509, %v504
          %v540 = vpack.c.b16 %v510, %v505
          %v541 = vpack.c.b16 %v516, %v511
          %v542 = vpack.c.b16 %v517, %v512
          %v543 = vpack.c.b16 %v518, %v513
          %v544 = vpack.c.b16 %v519, %v514
          %v545 = vpack.c.b16 %v520, %v515
          %v546 = vpack.c.b16 %v526, %v521
          %v547 = vpack.c.b16 %v527, %v522
          %v548 = vpack.c.b16 %v528, %v523
          %v549 = vpack.c.b16 %v529, %v524
          %v550 = vpack.c.b16 %v530, %v525
          %v651 = vunpack.c.l.b16 %v387
          %v652 = vunpack.c.l.b16 %v388
          %v653 = vunpack.c.l.b16 %v389
          %v654 = vunpack.c.l.b16 %v390
          %v655 = vunpack.c.l.b16 %v391
          %v656 = vunpack.c.l.b16 %v392
          %v657 = vunpack.c.l.b16 %v393
          %v658 = vunpack.c.l.b16 %v394
          %v659 = vunpack.c.l.b16 %v395
          %v660 = vunpack.c.l.b16 %v396
          %v661 = vunpack.c.l.b16 %v397
          %v662 = vunpack.c.l.b16 %v398
          %v663 = vunpack.c.l.b16 %v399
          %v664 = vunpack.c.l.b16 %v400
          %v665 = vunpack.c.l.b16 %v401
          %v666 = vunpack.c.l.b16 %v402
          %v667 = vunpack.c.l.b16 %v403
          %v668 = vunpack.c.l.b16 %v404
          %v669 = vunpack.c.l.b16 %v405
          %v670 = vunpack.c.l.b16 %v406
          %v671 = vunpack.c.l.b16 %v407
          %v672 = vunpack.c.l.b16 %v408
          %v673 = vunpack.c.l.b16 %v409
          %v674 = vunpack.c.l.b16 %v410
          %v675 = vunpack.c.l.b16 %v411
          %v676 = vunpack.c.l.b16 %v412
          %v677 = vunpack.c.l.b16 %v413
          %v678 = vunpack.c.l.b16 %v414
          %v679 = vunpack.c.l.b16 %v415
          %v680 = vunpack.c.l.b16 %v416
          %v681 = vunpack.c.l.b16 %v417
          %v682 = vunpack.c.l.b16 %v418
          %v683 = vunpack.c.l.b16 %v419
          %v684 = vunpack.c.l.b16 %v420
          %v685 = vunpack.c.l.b16 %v421
          %v686 = vunpack.c.l.b16 %v422
          %v687 = vunpack.c.l.b16 %v423
          %v688 = vunpack.c.l.b16 %v424
          %v689 = vunpack.c.l.b16 %v425
          %v690 = vunpack.c.l.b16 %v426
          %v691 = vunpack.c.l.b16 %v427
          %v692 = vunpack.c.l.b16 %v428
          %v693 = vunpack.c.l.b16 %v429
          %v694 = vunpack.c.l.b16 %v430
          %v695 = vunpack.c.l.b16 %v431
          %v696 = vunpack.c.l.b16 %v432
          %v697 = vunpack.c.l.b16 %v433
          %v698 = vunpack.c.l.b16 %v434
          %v699 = vunpack.c.l.b16 %v435
          %v700 = vunpack.c.l.b16 %v436
          %v701 = vunpack.c.l.b16 %v437
          %v702 = vunpack.c.l.b16 %v438
          %v703 = vunpack.c.l.b16 %v439
          %v704 = vunpack.c.l.b16 %v440
          %v705 = vunpack.c.l.b16 %v441
          %v706 = vunpack.c.l.b16 %v442
          %v707 = vunpack.c.l.b16 %v443
          %v708 = vunpack.c.l.b16 %v444
          %v709 = vunpack.c.l.b16 %v445
          %v710 = vunpack.c.l.b16 %v446
          %v711 = vunpack.c.l.b16 %v447
          %v712 = vunpack.c.l.b16 %v448
          %v713 = vunpack.c.l.b16 %v449
          %v714 = vunpack.c.l.b16 %v450
          %v715 = vunpack.c.l.b16 %v451
          %v716 = vunpack.c.l.b16 %v452
          %v717 = vunpack.c.l.b16 %v453
          %v718 = vunpack.c.l.b16 %v454
          %v719 = vunpack.c.l.b16 %v455
          %v720 = vunpack.c.l.b16 %v456
          %v721 = vunpack.c.l.b16 %v457
          %v722 = vunpack.c.l.b16 %v458
          %v723 = vunpack.c.l.b16 %v459
          %v724 = vunpack.c.l.b16 %v460
          %v725 = vunpack.c.l.b16 %v461
          %v726 = vunpack.c.l.b16 %v462
          %v727 = vunpack.c.l.b16 %v463
          %v728 = vunpack.c.l.b16 %v464
          %v729 = vunpack.c.l.b16 %v465
          %v730 = vunpack.c.l.b16 %v466
          %v731 = vpack.c.b16 %v652, %v651
          %v732 = vpack.c.b16 %v654, %v653
          %v733 = vpack.c.b16 %v656, %v655
          %v734 = vpack.c.b16 %v658, %v657
          %v735 = vpack.c.b16 %v660, %v659
          %v736 = vpack.c.b16 %v662, %v661
          %v737 = vpack.c.b16 %v664, %v663
          %v738 = vpack.c.b16 %v666, %v665
          %v739 = vpack.c.b16 %v668, %v667
          %v740 = vpack.c.b16 %v670, %v669
          %v741 = vpack.c.b16 %v672, %v671
          %v742 = vpack.c.b16 %v674, %v673
          %v743 = vpack.c.b16 %v676, %v675
          %v744 = vpack.c.b16 %v678, %v677
          %v745 = vpack.c.b16 %v680, %v679
          %v746 = vpack.c.b16 %v682, %v681
          %v747 = vpack.c.b16 %v684, %v683
          %v748 = vpack.c.b16 %v686, %v685
          %v749 = vpack.c.b16 %v688, %v687
          %v750 = vpack.c.b16 %v690, %v689
          %v751 = vpack.c.b16 %v692, %v691
          %v752 = vpack.c.b16 %v694, %v693
          %v753 = vpack.c.b16 %v696, %v695
          %v754 = vpack.c.b16 %v698, %v697
          %v755 = vpack.c.b16 %v700, %v699
          %v756 = vpack.c.b16 %v702, %v701
          %v757 = vpack.c.b16 %v704, %v703
          %v758 = vpack.c.b16 %v706, %v705
          %v759 = vpack.c.b16 %v708, %v707
          %v760 = vpack.c.b16 %v710, %v709
          %v761 = vpack.c.b16 %v712, %v711
          %v762 = vpack.c.b16 %v714, %v713
          %v763 = vpack.c.b16 %v716, %v715
          %v764 = vpack.c.b16 %v718, %v717
          %v765 = vpack.c.b16 %v720, %v719
          %v766 = vpack.c.b16 %v722, %v721
          %v767 = vpack.c.b16 %v724, %v723
          %v768 = vpack.c.b16 %v726, %v725
          %v769 = vpack.c.b16 %v728, %v727
          %v770 = vpack.c.b16 %v730, %v729
          %811 = vmatpush.bf16.msra.mxu0 %v738
          %812 = vmatpush.bf16.msra.mxu0 %v737
          %813 = vmatpush.bf16.msra.mxu0 %v736
          %814 = vmatpush.bf16.msra.mxu0 %v735
          %815 = vmatpush.bf16.msra.mxu0 %v734
          %816 = vmatpush.bf16.msra.mxu0 %v733
          %817 = vmatpush.bf16.msra.mxu0 %v732
          %818 = vmatpush.bf16.msra.mxu0 %v731
          %819 = vmatmul.bf16.gmra.mxu0 %v531
          %v820 = vpop.f32.mrf.mxu0
          %v821 = vadd.f32 0.0, %v820
          %v822 = vpop.f32.mrf.mxu0
          %v823 = vadd.f32 0.0, %v822
          %824 = vmatmul.bf16.gmra.mxu0 %v536
          %v825 = vpop.f32.mrf.mxu0
          %v826 = vadd.f32 0.0, %v825
          %v827 = vpop.f32.mrf.mxu0
          %v828 = vadd.f32 0.0, %v827
          %829 = vmatmul.bf16.gmra.mxu0 %v541
          %v830 = vpop.f32.mrf.mxu0
          %v831 = vadd.f32 0.0, %v830
          %v832 = vpop.f32.mrf.mxu0
          %v833 = vadd.f32 0.0, %v832
          %834 = vmatmul.bf16.gmra.mxu0 %v546
          %v835 = vpop.f32.mrf.mxu0
          %v836 = vadd.f32 0.0, %v835
          %v837 = vpop.f32.mrf.mxu0
          %v838 = vadd.f32 0.0, %v837
          %839 = vdwg.mxu0
          %840 = vmatpush.bf16.msra.mxu0 %v746
          %841 = vmatpush.bf16.msra.mxu0 %v745
          %842 = vmatpush.bf16.msra.mxu0 %v744
          %843 = vmatpush.bf16.msra.mxu0 %v743
          %844 = vmatpush.bf16.msra.mxu0 %v742
          %845 = vmatpush.bf16.msra.mxu0 %v741
          %846 = vmatpush.bf16.msra.mxu0 %v740
          %847 = vmatpush.bf16.msra.mxu0 %v739
          %848 = vmatmul.bf16.gmra.mxu0 %v532
          %v849 = vpop.f32.mrf.mxu0
          %v850 = vadd.f32 %v821, %v849
          %v851 = vpop.f32.mrf.mxu0
          %v852 = vadd.f32 %v823, %v851
          %853 = vmatmul.bf16.gmra.mxu0 %v537
          %v854 = vpop.f32.mrf.mxu0
          %v855 = vadd.f32 %v826, %v854
          %v856 = vpop.f32.mrf.mxu0
          %v857 = vadd.f32 %v828, %v856
          %858 = vmatmul.bf16.gmra.mxu0 %v542
          %v859 = vpop.f32.mrf.mxu0
          %v860 = vadd.f32 %v831, %v859
          %v861 = vpop.f32.mrf.mxu0
          %v862 = vadd.f32 %v833, %v861
          %863 = vmatmul.bf16.gmra.mxu0 %v547
          %v864 = vpop.f32.mrf.mxu0
          %v865 = vadd.f32 %v836, %v864
          %v866 = vpop.f32.mrf.mxu0
          %v867 = vadd.f32 %v838, %v866
          %868 = vdwg.mxu0
          %869 = vmatpush.bf16.msra.mxu0 %v754
          %870 = vmatpush.bf16.msra.mxu0 %v753
          %871 = vmatpush.bf16.msra.mxu0 %v752
          %872 = vmatpush.bf16.msra.mxu0 %v751
          %873 = vmatpush.bf16.msra.mxu0 %v750
          %874 = vmatpush.bf16.msra.mxu0 %v749
          %875 = vmatpush.bf16.msra.mxu0 %v748
          %876 = vmatpush.bf16.msra.mxu0 %v747
          %877 = vmatmul.bf16.gmra.mxu0 %v533
          %v878 = vpop.f32.mrf.mxu0
          %v879 = vadd.f32 %v850, %v878
          %v880 = vpop.f32.mrf.mxu0
          %v881 = vadd.f32 %v852, %v880
          %882 = vmatmul.bf16.gmra.mxu0 %v538
          %v883 = vpop.f32.mrf.mxu0
          %v884 = vadd.f32 %v855, %v883
          %v885 = vpop.f32.mrf.mxu0
          %v886 = vadd.f32 %v857, %v885
          %887 = vmatmul.bf16.gmra.mxu0 %v543
          %v888 = vpop.f32.mrf.mxu0
          %v889 = vadd.f32 %v860, %v888
          %v890 = vpop.f32.mrf.mxu0
          %v891 = vadd.f32 %v862, %v890
          %892 = vmatmul.bf16.gmra.mxu0 %v548
          %v893 = vpop.f32.mrf.mxu0
          %v894 = vadd.f32 %v865, %v893
          %v895 = vpop.f32.mrf.mxu0
          %v896 = vadd.f32 %v867, %v895
          %897 = vdwg.mxu0
          %898 = vmatpush.bf16.msra.mxu0 %v762
          %899 = vmatpush.bf16.msra.mxu0 %v761
          %900 = vmatpush.bf16.msra.mxu0 %v760
          %901 = vmatpush.bf16.msra.mxu0 %v759
          %902 = vmatpush.bf16.msra.mxu0 %v758
          %903 = vmatpush.bf16.msra.mxu0 %v757
          %904 = vmatpush.bf16.msra.mxu0 %v756
          %905 = vmatpush.bf16.msra.mxu0 %v755
          %906 = vmatmul.bf16.gmra.mxu0 %v534
          %v907 = vpop.f32.mrf.mxu0
          %v908 = vadd.f32 %v879, %v907
          %v909 = vpop.f32.mrf.mxu0
          %v910 = vadd.f32 %v881, %v909
          %911 = vmatmul.bf16.gmra.mxu0 %v539
          %v912 = vpop.f32.mrf.mxu0
          %v913 = vadd.f32 %v884, %v912
          %v914 = vpop.f32.mrf.mxu0
          %v915 = vadd.f32 %v886, %v914
          %916 = vmatmul.bf16.gmra.mxu0 %v544
          %v917 = vpop.f32.mrf.mxu0
          %v918 = vadd.f32 %v889, %v917
          %v919 = vpop.f32.mrf.mxu0
          %v920 = vadd.f32 %v891, %v919
          %921 = vmatmul.bf16.gmra.mxu0 %v549
          %v922 = vpop.f32.mrf.mxu0
          %v923 = vadd.f32 %v894, %v922
          %v924 = vpop.f32.mrf.mxu0
          %v925 = vadd.f32 %v896, %v924
          %926 = vdwg.mxu0
          %927 = vmatpush.bf16.msra.mxu0 %v770
          %928 = vmatpush.bf16.msra.mxu0 %v769
          %929 = vmatpush.bf16.msra.mxu0 %v768
          %930 = vmatpush.bf16.msra.mxu0 %v767
          %931 = vmatpush.bf16.msra.mxu0 %v766
          %932 = vmatpush.bf16.msra.mxu0 %v765
          %933 = vmatpush.bf16.msra.mxu0 %v764
          %934 = vmatpush.bf16.msra.mxu0 %v763
          %935 = vmatmul.bf16.gmra.mxu0 %v535
          %v936 = vpop.f32.mrf.mxu0
          %v937 = vadd.f32 %v908, %v936
          %v938 = vpop.f32.mrf.mxu0
          %v939 = vadd.f32 %v910, %v938
          %940 = vmatmul.bf16.gmra.mxu0 %v540
          %v941 = vpop.f32.mrf.mxu0
          %v942 = vadd.f32 %v913, %v941
          %v943 = vpop.f32.mrf.mxu0
          %v944 = vadd.f32 %v915, %v943
          %945 = vmatmul.bf16.gmra.mxu0 %v545
          %v946 = vpop.f32.mrf.mxu0
          %v947 = vadd.f32 %v918, %v946
          %v948 = vpop.f32.mrf.mxu0
          %v949 = vadd.f32 %v920, %v948
          %950 = vmatmul.bf16.gmra.mxu0 %v550
          %v951 = vpop.f32.mrf.mxu0
          %v952 = vadd.f32 %v923, %v951
          %v953 = vpop.f32.mrf.mxu0
          %v954 = vadd.f32 %v925, %v953
          %955 = vdwg.mxu0
          %v956 = vpack.c.bf16 %v937, %v937
          %v957 = vpack.c.bf16 %v939, %v939
          %v958 = vpack.c.bf16 %v942, %v942
          %v959 = vpack.c.bf16 %v944, %v944
          %v960 = vpack.c.bf16 %v947, %v947
          %v961 = vpack.c.bf16 %v949, %v949
          %v962 = vpack.c.bf16 %v952, %v952
          %v963 = vpack.c.bf16 %v954, %v954
          %964 = vst [vmem:[#allocation2] sm:$0xf] %v956
          %965 = vst [vmem:[#allocation2 + $0x4] sm:$0xf] %v957
          %966 = vst [vmem:[#allocation2 + $0x8] sm:$0xf] %v958
          %967 = vst [vmem:[#allocation2 + $0xc] sm:$0xf] %v959
          %968 = vst [vmem:[#allocation2 + $0x10] sm:$0xf] %v960
          %969 = vst [vmem:[#allocation2 + $0x14] sm:$0xf] %v961
          %970 = vst [vmem:[#allocation2 + $0x18] sm:$0xf] %v962
          %971 = vst [vmem:[#allocation2 + $0x1c] sm:$0xf] %v963
        $region52: #{tpu_custom_call.1} parent=35 // pred_fallthru
          _
        %v972 = vlaneseq
        %v973 = vshrl.u32 %v972, 7
        %v974 = vadd.s32 %v973, 8
        %v975 = vadd.s32 %v973, 16
        %v976 = vadd.s32 %v973, 24
        %v977 = vadd.s32 %v973, 32
        %v978 = vadd.s32 %v973, 40
        %v979 = vadd.s32 %v973, 48
        %v980 = vadd.s32 %v973, 56
        %v981 = vlaneseq
        %v982 = vand.u32 %v981, 127
        %vm983 = vcmp.lt.s32.totalorder %v973, 64
        %vm984 = vcmp.lt.s32.totalorder %v974, 64
        %vm985 = vcmp.lt.s32.totalorder %v975, 64
        %vm986 = vcmp.lt.s32.totalorder %v976, 64
        %vm987 = vcmp.lt.s32.totalorder %v977, 64
        %vm988 = vcmp.lt.s32.totalorder %v978, 64
        %vm989 = vcmp.lt.s32.totalorder %v979, 64
        %vm990 = vcmp.lt.s32.totalorder %v980, 64
        %s991 = smul.u32 %s32, 128
        %v992 = vstv %s991
        %v993 = vadd.s32 %v982, %v992
        %vm994 = vcmp.lt.s32.totalorder %v993, 16
        %vm995 = vmand %vm983, %vm994
        %vm996 = vmand %vm984, %vm994
        %vm997 = vmand %vm985, %vm994
        %vm998 = vmand %vm986, %vm994
        %vm999 = vmand %vm987, %vm994
        %vm1000 = vmand %vm988, %vm994
        %vm1001 = vmand %vm989, %vm994
        %vm1002 = vmand %vm990, %vm994
        %v1003 = vld [vmem:[#allocation2] sm:$0xf]
        %v1004 = vld [vmem:[#allocation2 + $0x4] sm:$0xf]
        %v1005 = vld [vmem:[#allocation2 + $0x8] sm:$0xf]
        %v1006 = vld [vmem:[#allocation2 + $0xc] sm:$0xf]
        %v1007 = vld [vmem:[#allocation2 + $0x10] sm:$0xf]
        %v1008 = vld [vmem:[#allocation2 + $0x14] sm:$0xf]
        %v1009 = vld [vmem:[#allocation2 + $0x18] sm:$0xf]
        %v1010 = vld [vmem:[#allocation2 + $0x1c] sm:$0xf]
        %v1011 = vld [vmem:[%s307] sm:$0xf]
        %v1012 = vld [vmem:[%s307 + $0x4] sm:$0xf]
        %v1013 = vld [vmem:[%s307 + $0x8] sm:$0xf]
        %v1014 = vld [vmem:[%s307 + $0xc] sm:$0xf]
        %v1015 = vld [vmem:[%s307 + $0x10] sm:$0xf]
        %v1016 = vld [vmem:[%s307 + $0x14] sm:$0xf]
        %v1017 = vld [vmem:[%s307 + $0x18] sm:$0xf]
        %v1018 = vld [vmem:[%s307 + $0x1c] sm:$0xf]
        %v1019 = vld [vmem:[%s307 + $0x20] sm:$0xf]
        %v1020 = vld [vmem:[%s307 + $0x24] sm:$0xf]
        %v1021 = vld [vmem:[%s307 + $0x28] sm:$0xf]
        %v1022 = vld [vmem:[%s307 + $0x2c] sm:$0xf]
        %v1023 = vld [vmem:[%s307 + $0x30] sm:$0xf]
        %v1024 = vld [vmem:[%s307 + $0x34] sm:$0xf]
        %v1025 = vld [vmem:[%s307 + $0x38] sm:$0xf]
        %v1026 = vld [vmem:[%s307 + $0x3c] sm:$0xf]
        %v1027 = vld [vmem:[%s356] sm:$0x1]
        %v1029 = vperm.slane %v1027, 0
        %v1039 = vunpack.c.l.b16 %v1003
        %v1040 = vunpack.c.l.b16 %v1004
        %v1041 = vunpack.c.l.b16 %v1005
        %v1042 = vunpack.c.l.b16 %v1006
        %v1043 = vunpack.c.l.b16 %v1007
        %v1044 = vunpack.c.l.b16 %v1008
        %v1045 = vunpack.c.l.b16 %v1009
        %v1046 = vunpack.c.l.b16 %v1010
        %v1047 = vpack.c.b16 %v1040, %v1039
        %v1048 = vpack.c.b16 %v1042, %v1041
        %v1049 = vpack.c.b16 %v1044, %v1043
        %v1050 = vpack.c.b16 %v1046, %v1045
        %v1071 = vunpack.c.l.b16 %v1011
        %v1072 = vunpack.c.l.b16 %v1012
        %v1073 = vunpack.c.l.b16 %v1013
        %v1074 = vunpack.c.l.b16 %v1014
        %v1075 = vunpack.c.l.b16 %v1015
        %v1076 = vunpack.c.l.b16 %v1016
        %v1077 = vunpack.c.l.b16 %v1017
        %v1078 = vunpack.c.l.b16 %v1018
        %v1079 = vunpack.c.l.b16 %v1019
        %v1080 = vunpack.c.l.b16 %v1020
        %v1081 = vunpack.c.l.b16 %v1021
        %v1082 = vunpack.c.l.b16 %v1022
        %v1083 = vunpack.c.l.b16 %v1023
        %v1084 = vunpack.c.l.b16 %v1024
        %v1085 = vunpack.c.l.b16 %v1025
        %v1086 = vunpack.c.l.b16 %v1026
        %v1087 = vpack.c.b16 %v1072, %v1071
        %v1088 = vpack.c.b16 %v1074, %v1073
        %v1089 = vpack.c.b16 %v1076, %v1075
        %v1090 = vpack.c.b16 %v1078, %v1077
        %v1091 = vpack.c.b16 %v1080, %v1079
        %v1092 = vpack.c.b16 %v1082, %v1081
        %v1093 = vpack.c.b16 %v1084, %v1083
        %v1094 = vpack.c.b16 %v1086, %v1085
        %1103 = vmatpush.bf16.msra.mxu0 %v1094
        %1104 = vmatpush.bf16.msra.mxu0 %v1093
        %1105 = vmatpush.bf16.msra.mxu0 %v1092
        %1106 = vmatpush.bf16.msra.mxu0 %v1091
        %1107 = vmatpush.bf16.msra.mxu0 %v1090
        %1108 = vmatpush.bf16.msra.mxu0 %v1089
        %1109 = vmatpush.bf16.msra.mxu0 %v1088
        %1110 = vmatpush.bf16.msra.mxu0 %v1087
        %1111 = vmatmul.bf16.gmra.mxu0 %v1047
        %v1112 = vpop.f32.mrf.mxu0
        %v1113 = vadd.f32 %v1029, %v1112
        %v1114 = vpop.f32.mrf.mxu0
        %v1115 = vadd.f32 %v1029, %v1114
        %1116 = vmatmul.bf16.gmra.mxu0 %v1048
        %v1117 = vpop.f32.mrf.mxu0
        %v1118 = vadd.f32 %v1029, %v1117
        %v1119 = vpop.f32.mrf.mxu0
        %v1120 = vadd.f32 %v1029, %v1119
        %1121 = vmatmul.bf16.gmra.mxu0 %v1049
        %v1122 = vpop.f32.mrf.mxu0
        %v1123 = vadd.f32 %v1029, %v1122
        %v1124 = vpop.f32.mrf.mxu0
        %v1125 = vadd.f32 %v1029, %v1124
        %1126 = vmatmul.bf16.gmra.mxu0 %v1050
        %v1127 = vpop.f32.mrf.mxu0
        %v1128 = vadd.f32 %v1029, %v1127
        %v1129 = vpop.f32.mrf.mxu0
        %v1130 = vadd.f32 %v1029, %v1129
        %1131 = vdwg.mxu0
        %v1132 = vpack.c.bf16 %v1113, %v1113
        %v1133 = vpack.c.bf16 %v1115, %v1115
        %v1134 = vpack.c.bf16 %v1118, %v1118
        %v1135 = vpack.c.bf16 %v1120, %v1120
        %v1136 = vpack.c.bf16 %v1123, %v1123
        %v1137 = vpack.c.bf16 %v1125, %v1125
        %v1138 = vpack.c.bf16 %v1128, %v1128
        %v1139 = vpack.c.bf16 %v1130, %v1130
        %1140 = vst [vmem:[%s343] sm:$0xf] %v1132
        %1141 = vst [vmem:[%s343 + $0x4] sm:$0xf] %v1133
        %1142 = vst [vmem:[%s343 + $0x8] sm:$0xf] %v1134
        %1143 = vst [vmem:[%s343 + $0xc] sm:$0xf] %v1135
        %1144 = vst [vmem:[%s343 + $0x10] sm:$0xf] %v1136
        %1145 = vst [vmem:[%s343 + $0x14] sm:$0xf] %v1137
        %1146 = vst [vmem:[%s343 + $0x18] sm:$0xf] %v1138
        %1147 = vst [vmem:[%s343 + $0x1c] sm:$0xf] %v1139
        %v1148 = vsel %vm995, %v1113, -inf
        %v1149 = vsel %vm996, %v1115, -inf
        %v1150 = vsel %vm997, %v1118, -inf
        %v1151 = vsel %vm998, %v1120, -inf
        %v1152 = vsel %vm999, %v1123, -inf
        %v1153 = vsel %vm1000, %v1125, -inf
        %v1154 = vsel %vm1001, %v1128, -inf
        %v1155 = vsel %vm1002, %v1130, -inf
        %v1156 = vmax.f32 %v1148, %v1152
        %v1157 = vmax.f32 %v1149, %v1153
        %v1158 = vmax.f32 %v1150, %v1154
        %v1159 = vmax.f32 %v1151, %v1155
        %v1160 = vmax.f32 %v1156, %v1157
        %v1161 = vmax.f32 %v1158, %v1159
        %v1162 = vmax.f32 %v1160, %v1161
        %1163 = vmax.xlane.f32.xlu0 %v1162
        %v1164 = vpop.xlane.xlu0 %1163
        %v1165 = vrot.slane %v1164, 4
        %v1166 = vmax.f32 %v1164, %v1165
        %v1167 = vrot.slane %v1166, 2
        %v1168 = vmax.f32 %v1166, %v1167
        %v1169 = vrot.slane %v1168, 1
        %v1170 = vmax.f32 %v1168, %v1169
        %s1171 = vtos %v1170
        %v1172 = vstv %s1171
        %1173 = vst [vmem:[%s349] sm:$0x1] %v1172
        %s1174 = sand.u32 %s152, 1
        %s1175 = scalar_lea.sflag [#allocation5], %s1174
        %s1176 = sand.u32 %s152, 1
        %s1177 = smul.addr %s1176, 32
        %s1178 = scalar_lea.vmem [#allocation9], %s1177
        %s1179 = sand.u32 %s180, 1
        %s1180 = scalar_lea.sflag [#allocation11], %s1179
        %s1181 = sand.u32 %s180, 1
        %s1182 = scalar_lea.vmem [#allocation10], %s1181
        // Predicated region
        $region53: #{tpu_custom_call.1} parent=35 // pred_check
          %p1183 = pneg %p162
        $region54: #{tpu_custom_call.1} parent=35 // pred_check_branch
          %1185 = sbr.rel (%p1183) target = $region56
        $region55: #{tpu_custom_call.1} parent=35 // pred_region
          %s1186 = smul.u32 8, %s31
          %1188 = vsyncadd %s1175, 0
          %s1189 = sadd.s32 %s32, %s1186
          %s1190 = smul.addr %s1189, 4
          %s1191 = scalar_lea.hbm %s4, %s1190
          %s1192 = sshll.u32 %s1178, 4
          %s1193 = int_to_ptr.vmem [resolvable:$true] %s1192
          %s1194 = sshll.u32 %s1191, 4
          %s1195 = int_to_ptr.hbm [resolvable:$true] %s1194
          %1200 = dma.vmem_to_hbm [thread:$0]  %s1193, 512, %s1195, %s1175, 64, 64, 4
        $region56: #{tpu_custom_call.1} parent=35 // pred_fallthru
          _
        // Predicated region
        $region57: #{tpu_custom_call.1} parent=35 // pred_check
          %p1201 = pneg %p190
        $region58: #{tpu_custom_call.1} parent=35 // pred_check_branch
          %1203 = sbr.rel (%p1201) target = $region60
        $region59: #{tpu_custom_call.1} parent=35 // pred_region
          %s1204 = sadd.s32 %s31, %s32
          %1206 = vsyncadd %s1180, 0
          %s1207 = scalar_lea.hbm %s5, %s1204
          %s1209 = sshll.u32 %s1182, 4
          %s1210 = int_to_ptr.vmem [resolvable:$true] %s1209
          %s1211 = sshll.u32 %s1207, 4
          %s1212 = int_to_ptr.hbm [resolvable:$true] %s1211
          %1214 = dma.vmem_to_hbm [thread:$0]  %s1210, 16, %s1212, %s1180
        $region60: #{tpu_custom_call.1} parent=35 // pred_fallthru
          _
      $region36: #{tpu_custom_call.1} parent=5 // pred_fallthru
        _
      %p1215 = scmp.le.s32.totalorder 2, %s22
      // Predicated region
      $region61: #{tpu_custom_call.1} parent=5 // pred_check
        %p1216 = pneg %p1215
      $region62: #{tpu_custom_call.1} parent=5 // pred_check_branch
        %1218 = sbr.rel (%p1216) target = $region64
      $region63: #{tpu_custom_call.1} parent=5 // pred_region
        %s1219 = ssub.s32 %s22, 2
        // Predicated region
        $region65: #{tpu_custom_call.1} parent=63 // pred_check
          %p1220 = pneg %p168
        $region66: #{tpu_custom_call.1} parent=63 // pred_check_branch
          %1222 = sbr.rel (%p1220) target = $region68
        $region67: #{tpu_custom_call.1} parent=63 // pred_region
          %s1223 = sand.u32 %s153, 1
          %s1224 = scalar_lea.sflag [#allocation5], %s1223
          %s1225 = sand.u32 %s153, 1
          %s1226 = smul.addr %s1225, 32
          %s1227 = scalar_lea.vmem [#allocation9], %s1226
          %1229 = dma.done %s1224, 512
        $region68: #{tpu_custom_call.1} parent=63 // pred_fallthru
          _
        // Predicated region
        $region69: #{tpu_custom_call.1} parent=63 // pred_check
          %p1230 = pneg %p196
        $region70: #{tpu_custom_call.1} parent=63 // pred_check_branch
          %1232 = sbr.rel (%p1230) target = $region72
        $region71: #{tpu_custom_call.1} parent=63 // pred_region
          %s1233 = sand.u32 %s181, 1
          %s1234 = scalar_lea.sflag [#allocation11], %s1233
          %s1235 = sand.u32 %s181, 1
          %s1236 = scalar_lea.vmem [#allocation10], %s1235
          %1238 = dma.done %s1234, 16
        $region72: #{tpu_custom_call.1} parent=63 // pred_fallthru
          _
      $region64: #{tpu_custom_call.1} parent=5 // pred_fallthru
        _
    $region6: #{tpu_custom_call.1} parent=1 // loop_footer
      %s26 = sadd.s32 1, %s22
    $region7: #{tpu_custom_call.1} parent=1 // loop_footer_branch
      %21 = sbr.rel target = $region3
    $region8: #{tpu_custom_call.1} parent=1 // loop_exit
      _
    %1239 = vsyncpa [#allocation4], 1
    %s1240 = scalar_lea.sflag [#allocation4], 1
    %1241 = vsyncpa %s1240, 1
    %1242 = vsyncpa [#allocation7], 1
    %1243 = vsyncpa [#allocation5], 1
    %s1244 = scalar_lea.sflag [#allocation5], 1
    %1245 = vsyncpa %s1244, 1
    %1246 = vsyncpa [#allocation11], 1
    %s1247 = scalar_lea.sflag [#allocation11], 1
    %1248 = vsyncpa %s1247, 1

</llo_original>
